<compile_context>
chip_gen: v5e
topology: v5e:2x2
jax: 0.10.0
libtpu: 0.0.40
codegen_flags: <defaults>
</compile_context>

<pallas_src>
import jax
import jax.numpy as jnp
from jax.experimental import pallas as pl
from jax.experimental.pallas import tpu as pltpu

IN_FEATURES = 2          # MountainCar observation dim: [position, velocity]
HIDDEN = 32
N_ACTIONS = 3            # env.action_space.n for MountainCar-v0
N_PAD = 8                # action dim zero-padded to one sublane group
LANES = 128              # batch (lane) granularity
MAX_BATCH_BLOCK = 8192   # max lanes (batch rows) per grid step


def _round_up(x, m):
    return ((x + m - 1) // m) * m


def _choose_block(batch):
    """Pick (block_b, b_pad): batch padded to 128-lane multiples; multi-block
    grids keep an even block count so v7x's two TensorCores stay balanced."""
    b_lanes = _round_up(max(batch, 1), LANES)
    if b_lanes <= MAX_BATCH_BLOCK:
        return b_lanes, b_lanes
    n_blocks = pl.cdiv(b_lanes, MAX_BATCH_BLOCK)
    if n_blocks % 2:
        n_blocks += 1
    block_b = _round_up(pl.cdiv(b_lanes, n_blocks), LANES)
    return block_b, n_blocks * block_b


def _dqn_kernel(xt_ref, w1t_ref, b1t_ref, w2t_ref, b2t_ref, ot_ref):
    xt = xt_ref[...]                                   # (2, Bblk)  batch on lanes
    w1t = w1t_ref[...]                                 # (HIDDEN, 2)
    # fc1 (K=2) as lane-dense VPU FMAs: sublane-broadcast the two x rows,
    # lane-broadcast the per-hidden-unit weight/bias columns. Then ReLU.
    ht = (w1t[:, 0:1] * xt[0:1, :]
          + w1t[:, 1:2] * xt[1:2, :]
          + b1t_ref[...])                              # (HIDDEN, Bblk)
    ht = jnp.maximum(ht, 0.0)
    # fc2 on the MXU: (N_PAD, HIDDEN) @ (HIDDEN, Bblk) -> lane-dense output.
    yt = jnp.dot(w2t_ref[...], ht, preferred_element_type=jnp.float32)
    ot_ref[...] = (yt + b2t_ref[...]).astype(ot_ref.dtype)


def prepare_params(w1, b1, w2, b2):
    """One-time layout prep (hoisted out of the forward path): transpose to the
    batch-on-lanes layout and zero-pad the action dim 3 -> 8 sublanes."""
    n_act = w2.shape[1]
    w1t = jnp.asarray(w1).T                                    # (HIDDEN, 2)
    b1t = jnp.asarray(b1).reshape(HIDDEN, 1)                   # (HIDDEN, 1)
    w2t = jnp.pad(jnp.asarray(w2).T, ((0, N_PAD - n_act), (0, 0)))      # (8, HIDDEN)
    b2t = jnp.pad(jnp.asarray(b2).reshape(n_act, 1), ((0, N_PAD - n_act), (0, 0)))  # (8, 1)
    return w1t, b1t, w2t, b2t


def dqn_forward(x, params, n_actions=N_ACTIONS):
    """x: [B, 2] float32 -> [B, n_actions] float32 Q-values."""
    w1t, b1t, w2t, b2t = params
    B = x.shape[0]
    block_b, b_pad = _choose_block(B)

    # Batch-on-lanes input: (2, b_pad), zero-padded batch columns.
    xt = jnp.pad(x, ((0, b_pad - B), (0, 0))).T
    grid = (b_pad // block_b,)

    out_t = pl.pallas_call(
        _dqn_kernel,
        out_shape=jax.ShapeDtypeStruct((N_PAD, b_pad), jnp.float32),
        grid=grid,
        in_specs=[
            pl.BlockSpec((IN_FEATURES, block_b), lambda i: (0, i)),   # x^T
            pl.BlockSpec((HIDDEN, IN_FEATURES), lambda i: (0, 0)),    # w1^T
            pl.BlockSpec((HIDDEN, 1), lambda i: (0, 0)),              # b1^T
            pl.BlockSpec((N_PAD, HIDDEN), lambda i: (0, 0)),          # w2^T (padded)
            pl.BlockSpec((N_PAD, 1), lambda i: (0, 0)),               # b2^T (padded)
        ],
        out_specs=pl.BlockSpec((N_PAD, block_b), lambda i: (0, i)),
        compiler_params=pltpu.CompilerParams(
            dimension_semantics=("parallel",)),
    )(xt, w1t, b1t, w2t, b2t)

    # IMPORTANT: always slice padded action rows / batch columns off BEFORE any
    # argmax etc. (padded entries are not real Q-values).
    return out_t[:n_actions, :B].T


def init_params(key):
    """Deterministic init matching torch.nn.Linear's default
    U(-1/sqrt(fan_in), 1/sqrt(fan_in)) scheme (weights stored as [in, out])."""
    k1, k2, k3, k4 = jax.random.split(key, 4)
    bound1 = 1.0 / jnp.sqrt(jnp.float32(IN_FEATURES))
    bound2 = 1.0 / jnp.sqrt(jnp.float32(HIDDEN))
    w1 = jax.random.uniform(k1, (IN_FEATURES, HIDDEN), jnp.float32, -bound1, bound1)
    b1 = jax.random.uniform(k2, (1, HIDDEN), jnp.float32, -bound1, bound1)
    w2 = jax.random.uniform(k3, (HIDDEN, N_ACTIONS), jnp.float32, -bound2, bound2)
    b2 = jax.random.uniform(k4, (1, N_ACTIONS), jnp.float32, -bound2, bound2)
    return w1, b1, w2, b2


def reference_forward(x, w1, b1, w2, b2):
    h = jnp.maximum(x @ w1 + b1, 0.0)
    return h @ w2 + b2


# TODO(synk): the PyTorch module also carries MSELoss / Adam for training;
# only the forward pass is implemented here.

if __name__ == "__main__":
    key = jax.random.PRNGKey(0)
    k_params, k_x1, k_x2 = jax.random.split(key, 3)

    w1, b1, w2, b2 = init_params(k_params)
    params = prepare_params(w1, b1, w2, b2)   # one-time layout prep

    # Small batch of MountainCar observations (acting path): [position, velocity]
    B = 8
    x = jax.random.uniform(k_x1, (B, IN_FEATURES), jnp.float32, -1.0, 1.0)
    q = jax.block_until_ready(dqn_forward(x, params))
    q_ref = reference_forward(x, w1, b1, w2, b2)
    assert q.shape == (B, N_ACTIONS)
    assert jnp.allclose(q, q_ref, atol=1e-5, rtol=1e-5), "mismatch vs. reference (B=8)"

    # Training-scale batch exercising the multi-block ("parallel") grid path:
    # B=9000 -> 2 blocks of 4608 lanes each (even count for v7x's two TCs).
    B2 = 9000
    x2 = jax.random.uniform(k_x2, (B2, IN_FEATURES), jnp.float32, -1.0, 1.0)
    q2 = jax.block_until_ready(dqn_forward(x2, params))
    q2_ref = reference_forward(x2, w1, b1, w2, b2)
    assert q2.shape == (B2, N_ACTIONS)
    assert jnp.allclose(q2, q2_ref, atol=1e-5, rtol=1e-5), "mismatch vs. reference (B=9000)"

    print("KERNEL_OK")
</pallas_src>

<mosaic_0001>
module attributes {stable_mosaic.version = 11 : i64} {
  func.func @_dqn_kernel(%arg0: i32, %arg1: memref<2x128xf32, #tpu.memory_space<vmem>>, %arg2: memref<32x2xf32, #tpu.memory_space<vmem>>, %arg3: memref<32x1xf32, #tpu.memory_space<vmem>>, %arg4: memref<8x32xf32, #tpu.memory_space<vmem>>, %arg5: memref<8x1xf32, #tpu.memory_space<vmem>>, %arg6: memref<8x128xf32, #tpu.memory_space<vmem>>) attributes {dimension_semantics = [#tpu.dimension_semantics<parallel>], iteration_bounds = array<i64: 1>, scalar_prefetch = 0 : i64, scratch_operands = 0 : i64, tpu.core_type = #tpu.core_type<tc>, window_params = [{transform_indices = @transform_0, window_bounds = array<i64: 2, 128>}, {pipeline_mode = #tpu.pipeline_mode<synchronous>, transform_indices = @transform_1, window_bounds = array<i64: 32, 2>}, {pipeline_mode = #tpu.pipeline_mode<synchronous>, transform_indices = @transform_2, window_bounds = array<i64: 32, 1>}, {pipeline_mode = #tpu.pipeline_mode<synchronous>, transform_indices = @transform_3, window_bounds = array<i64: 8, 32>}, {pipeline_mode = #tpu.pipeline_mode<synchronous>, transform_indices = @transform_4, window_bounds = array<i64: 8, 1>}, {transform_indices = @transform_5, window_bounds = array<i64: 8, 128>}]} {
    %c0 = arith.constant 0 : index
    %c0_0 = arith.constant 0 : index
    %0 = vector.load %arg1[%c0, %c0_0] : memref<2x128xf32, #tpu.memory_space<vmem>>, vector<2x128xf32>
    %c0_1 = arith.constant 0 : index
    %c0_2 = arith.constant 0 : index
    %1 = vector.load %arg2[%c0_1, %c0_2] : memref<32x2xf32, #tpu.memory_space<vmem>>, vector<32x2xf32>
    %2 = vector.extract_strided_slice %1 {offsets = [0, 0], sizes = [32, 1], strides = [1, 1]} : vector<32x2xf32> to vector<32x1xf32>
    %3 = vector.extract_strided_slice %0 {offsets = [0, 0], sizes = [1, 128], strides = [1, 1]} : vector<2x128xf32> to vector<1x128xf32>
    %4 = vector.broadcast %2 : vector<32x1xf32> to vector<32x128xf32>
    %5 = vector.broadcast %3 : vector<1x128xf32> to vector<32x128xf32>
    %6 = arith.mulf %4, %5 : vector<32x128xf32>
    %7 = vector.extract_strided_slice %1 {offsets = [0, 1], sizes = [32, 1], strides = [1, 1]} : vector<32x2xf32> to vector<32x1xf32>
    %8 = vector.extract_strided_slice %0 {offsets = [1, 0], sizes = [1, 128], strides = [1, 1]} : vector<2x128xf32> to vector<1x128xf32>
    %9 = vector.broadcast %7 : vector<32x1xf32> to vector<32x128xf32>
    %10 = vector.broadcast %8 : vector<1x128xf32> to vector<32x128xf32>
    %11 = arith.mulf %9, %10 : vector<32x128xf32>
    %12 = arith.addf %6, %11 : vector<32x128xf32>
    %c0_3 = arith.constant 0 : index
    %c0_4 = arith.constant 0 : index
    %13 = vector.load %arg3[%c0_3, %c0_4] : memref<32x1xf32, #tpu.memory_space<vmem>>, vector<32x1xf32>
    %14 = vector.broadcast %13 : vector<32x1xf32> to vector<32x128xf32>
    %15 = arith.addf %12, %14 : vector<32x128xf32>
    %cst = arith.constant 0.000000e+00 : f32
    %16 = vector.broadcast %cst : f32 to vector<32x128xf32>
    %17 = arith.maximumf %15, %16 : vector<32x128xf32>
    %c0_5 = arith.constant 0 : index
    %c0_6 = arith.constant 0 : index
    %18 = vector.load %arg4[%c0_5, %c0_6] : memref<8x32xf32, #tpu.memory_space<vmem>>, vector<8x32xf32>
    %cst_7 = arith.constant dense<0.000000e+00> : vector<8x128xf32>
    %19 = tpu.matmul %18, %17, %cst_7 {dimension_numbers = #tpu.dot_dimension_numbers<[1], [0], [0], [1], [0, 0, 1, 1], [], []>} : vector<8x32xf32>, vector<32x128xf32>, vector<8x128xf32> -> vector<8x128xf32>
    %c0_8 = arith.constant 0 : index
    %c0_9 = arith.constant 0 : index
    %20 = vector.load %arg5[%c0_8, %c0_9] : memref<8x1xf32, #tpu.memory_space<vmem>>, vector<8x1xf32>
    %21 = vector.broadcast %20 : vector<8x1xf32> to vector<8x128xf32>
    %22 = arith.addf %19, %21 : vector<8x128xf32>
    %c0_10 = arith.constant 0 : index
    %c0_11 = arith.constant 0 : index
    %23 = vector.load %arg6[%c0_10, %c0_11] : memref<8x128xf32, #tpu.memory_space<vmem>>, vector<8x128xf32>
    tpu.vector_store %arg6[%c0_10, %c0_11], %22 {strides = array<i32>} : memref<8x128xf32, #tpu.memory_space<vmem>>, vector<8x128xf32>,
    return
  }
  func.func @transform_0(%arg0: i32) -> (i32, i32) {
    %c0_i32 = arith.constant 0 : i32
    %c0_i32_0 = arith.constant 0 : i32
    return %c0_i32, %arg0 : i32, i32
  }
  func.func @transform_1(%arg0: i32) -> (i32, i32) {
    %c0_i32 = arith.constant 0 : i32
    %c0_i32_0 = arith.constant 0 : i32
    %c0_i32_1 = arith.constant 0 : i32
    return %c0_i32, %c0_i32_0 : i32, i32
  }
  func.func @transform_2(%arg0: i32) -> (i32, i32) {
    %c0_i32 = arith.constant 0 : i32
    %c0_i32_0 = arith.constant 0 : i32
    %c0_i32_1 = arith.constant 0 : i32
    return %c0_i32, %c0_i32_0 : i32, i32
  }
  func.func @transform_3(%arg0: i32) -> (i32, i32) {
    %c0_i32 = arith.constant 0 : i32
    %c0_i32_0 = arith.constant 0 : i32
    %c0_i32_1 = arith.constant 0 : i32
    return %c0_i32, %c0_i32_0 : i32, i32
  }
  func.func @transform_4(%arg0: i32) -> (i32, i32) {
    %c0_i32 = arith.constant 0 : i32
    %c0_i32_0 = arith.constant 0 : i32
    %c0_i32_1 = arith.constant 0 : i32
    return %c0_i32, %c0_i32_0 : i32, i32
  }
  func.func @transform_5(%arg0: i32) -> (i32, i32) {
    %c0_i32 = arith.constant 0 : i32
    %c0_i32_0 = arith.constant 0 : i32
    return %c0_i32, %arg0 : i32, i32
  }
}

</mosaic_0001>

<llo_original>
// kernel: tpu_custom_call.1
$region0: #{tpu_custom_call.1}
  #allocation0 [shape = 'u32[]', space=smem, size = 0x4, offset = 0x4, fixed_abs, tag = 'smem constant byte address 0x4 - core index']
  #allocation1 [shape = 'u32[72,128]{1,0:T(1,128)}', space=vmem, size = 0x9000, scoped, tag = 'internal scratch']
  %s0 = inlined_call_operand.vmem [shape: f32[2,128], index: 0, kind: input, shape index: {}]
  %s1 = inlined_call_operand.vmem [shape: f32[32,2], index: 1, kind: input, shape index: {}]
  %s2 = inlined_call_operand.vmem [shape: f32[32,1], index: 2, kind: input, shape index: {}]
  %s3 = inlined_call_operand.vmem [shape: f32[8,32], index: 3, kind: input, shape index: {}]
  %s4 = inlined_call_operand.vmem [shape: f32[8,1], index: 4, kind: input, shape index: {}]
  %s5 = inlined_call_operand.hbm [shape: f32[8,128], index: 5, kind: output, shape index: {}]
  %s6 = sld [smem:[#allocation0]]
  $region30: #{tpu_custom_call.1} parent=0
    _
  %s8 = ssub.s32 1, %s6
  %s9 = scalar_select 0, %s8, %s6
  $region1: #{tpu_custom_call.1} parent=0
    #allocation2 [shape = 'u8[4096]{0}', space=vmem, size = 0x1000, scoped, tag = 'output window, operand 0, single buffered']
    #allocation3 [shape = 's32[1]{0}', space=sflag, size = 0x4, scoped, tag = 'scoped memory for tpu_custom_call.1']
    %10 = vsyncpa [#allocation3], 0
    // Predicated region
    $region2: #{tpu_custom_call.1} parent=1 // pred_check
      _
    $region3: #{tpu_custom_call.1} parent=1 // pred_check_branch
      %12 = sbr.rel (0) target = $region5
    $region4: #{tpu_custom_call.1} parent=1 // pred_region
      _
    $region5: #{tpu_custom_call.1} parent=1 // pred_fallthru
      _
    // Predicated region
    $region6: #{tpu_custom_call.1} parent=1 // pred_check
      _
    $region7: #{tpu_custom_call.1} parent=1 // pred_check_branch
      %14 = sbr.rel (0) target = $region9
    $region8: #{tpu_custom_call.1} parent=1 // pred_region
      _
    $region9: #{tpu_custom_call.1} parent=1 // pred_fallthru
      _
    // Predicated region
    $region10: #{tpu_custom_call.1} parent=1 // pred_check
      _
    $region11: #{tpu_custom_call.1} parent=1 // pred_check_branch
      %16 = sbr.rel (0) target = $region13
    $region12: #{tpu_custom_call.1} parent=1 // pred_region
      _
    $region13: #{tpu_custom_call.1} parent=1 // pred_fallthru
      _
    // Predicated region
    $region14: #{tpu_custom_call.1} parent=1 // pred_check
      _
    $region15: #{tpu_custom_call.1} parent=1 // pred_check_branch
      %18 = sbr.rel (0) target = $region17
    $region16: #{tpu_custom_call.1} parent=1 // pred_region
      _
    $region17: #{tpu_custom_call.1} parent=1 // pred_fallthru
      _
    // Predicated region
    $region18: #{tpu_custom_call.1} parent=1 // pred_check
      _
    $region19: #{tpu_custom_call.1} parent=1 // pred_check_branch
      %20 = sbr.rel (0) target = $region21
    $region20: #{tpu_custom_call.1} parent=1 // pred_region
      _
    $region21: #{tpu_custom_call.1} parent=1 // pred_fallthru
      _
    %v21 = vld [vmem:[%s0] sm:$0x3]
    %v22 = vld [vmem:[%s1] sm:$0xff]
    %v23 = vld [vmem:[%s1 + $0x8] sm:$0xff]
    %v24 = vld [vmem:[%s1 + $0x10] sm:$0xff]
    %v25 = vld [vmem:[%s1 + $0x18] sm:$0xff]
    %27 = vset.pattern.permute.xlu0 0
    %28 = vperm.xlu0 %27, %v22
    %v29 = vpop.permute.xlu0 %28
    %32 = vset.pattern.permute.xlu0 0
    %33 = vperm.xlu0 %32, %v23
    %v34 = vpop.permute.xlu0 %33
    %37 = vset.pattern.permute.xlu0 0
    %38 = vperm.xlu0 %37, %v24
    %v39 = vpop.permute.xlu0 %38
    %42 = vset.pattern.permute.xlu0 0
    %43 = vperm.xlu0 %42, %v25
    %v44 = vpop.permute.xlu0 %43
    %v46 = vperm.slane %v21, 0
    %v47 = vmul.f32 %v29, %v46
    %v48 = vmul.f32 %v34, %v46
    %v49 = vmul.f32 %v39, %v46
    %v50 = vmul.f32 %v44, %v46
    %51 = vset.pattern.permute.xlu0 1
    %52 = vperm.xlu0 %51, %v22
    %v53 = vpop.permute.xlu0 %52
    %55 = vset.pattern.permute.xlu0 1
    %56 = vperm.xlu0 %55, %v23
    %v57 = vpop.permute.xlu0 %56
    %59 = vset.pattern.permute.xlu0 1
    %60 = vperm.xlu0 %59, %v24
    %v61 = vpop.permute.xlu0 %60
    %63 = vset.pattern.permute.xlu0 1
    %64 = vperm.xlu0 %63, %v25
    %v65 = vpop.permute.xlu0 %64
    %v67 = vperm.slane %v21, 1
    %v68 = vmul.f32 %v53, %v67
    %v69 = vmul.f32 %v57, %v67
    %v70 = vmul.f32 %v61, %v67
    %v71 = vmul.f32 %v65, %v67
    %v72 = vadd.f32 %v47, %v68
    %v73 = vadd.f32 %v48, %v69
    %v74 = vadd.f32 %v49, %v70
    %v75 = vadd.f32 %v50, %v71
    %v76 = vld [vmem:[%s2] sm:$0xff]
    %v77 = vld [vmem:[%s2 + $0x8] sm:$0xff]
    %v78 = vld [vmem:[%s2 + $0x10] sm:$0xff]
    %v79 = vld [vmem:[%s2 + $0x18] sm:$0xff]
    %81 = vset.pattern.permute.xlu0 0
    %82 = vperm.xlu0 %81, %v76
    %v83 = vpop.permute.xlu0 %82
    %86 = vset.pattern.permute.xlu0 0
    %87 = vperm.xlu0 %86, %v77
    %v88 = vpop.permute.xlu0 %87
    %91 = vset.pattern.permute.xlu0 0
    %92 = vperm.xlu0 %91, %v78
    %v93 = vpop.permute.xlu0 %92
    %96 = vset.pattern.permute.xlu0 0
    %97 = vperm.xlu0 %96, %v79
    %v98 = vpop.permute.xlu0 %97
    %v100 = vadd.f32 %v72, %v83
    %v101 = vadd.f32 %v73, %v88
    %v102 = vadd.f32 %v74, %v93
    %v103 = vadd.f32 %v75, %v98
    %v104 = vmax.f32 %v100, 0.0
    %v105 = vmax.f32 %v101, 0.0
    %v106 = vmax.f32 %v102, 0.0
    %v107 = vmax.f32 %v103, 0.0
    %v108 = vld [vmem:[%s3] sm:$0xff]
    %v109 = vld [vmem:[%s4] sm:$0xff]
    %111 = vset.pattern.permute.xlu0 0
    %112 = vperm.xlu0 %111, %v109
    %v113 = vpop.permute.xlu0 %112
    %vm115 = vcmask 261120
    %v117 = vsel %vm115, %v108, 0
    %119 = vmatpush.msra.mxu0 0.0
    %120 = vmatpush.msra.mxu0 0.0
    %121 = vmatpush.msra.mxu0 0.0
    %122 = vmatpush.msra.mxu0 0.0
    %123 = vmatpush.msra.mxu0 0.0
    %124 = vmatpush.msra.mxu0 0.0
    %125 = vmatpush.msra.mxu0 0.0
    %126 = vmatpush.msra.mxu0 0.0
    %127 = vmatpush.msra.mxu0 0.0
    %128 = vmatpush.msra.mxu0 0.0
    %129 = vmatpush.msra.mxu0 0.0
    %130 = vmatpush.msra.mxu0 0.0
    %131 = vmatpush.msra.mxu0 %v107
    %132 = vmatpush.msra.mxu0 %v106
    %133 = vmatpush.msra.mxu0 %v105
    %134 = vmatpush.msra.mxu0 %v104
    %135 = vmatmul.f32.gmra.mxu0 %v117
    %v136 = vpop.f32.mrf.mxu0
    %v137 = vadd.f32 %v113, %v136
    %138 = vdwg.mxu0
    %139 = vst [vmem:[#allocation2] sm:$0xff] %v137
    // Predicated region
    $region22: #{tpu_custom_call.1} parent=1 // pred_check
      _
    $region23: #{tpu_custom_call.1} parent=1 // pred_check_branch
      %141 = sbr.rel (0) target = $region25
    $region24: #{tpu_custom_call.1} parent=1 // pred_region
      %143 = vsyncadd [#allocation3], 0
      %s145 = sshll.u32 [#allocation2], 4
      %s146 = int_to_ptr.vmem [resolvable:$true] %s145
      %s147 = sshll.u32 %s5, 4
      %s148 = int_to_ptr.hbm [resolvable:$true] %s147
      %150 = dma.vmem_to_hbm [thread:$0]  %s146, 128, %s148, [#allocation3]
    $region25: #{tpu_custom_call.1} parent=1 // pred_fallthru
      _
    // Predicated region
    $region26: #{tpu_custom_call.1} parent=1 // pred_check
      _
    $region27: #{tpu_custom_call.1} parent=1 // pred_check_branch
      %152 = sbr.rel (0) target = $region29
    $region28: #{tpu_custom_call.1} parent=1 // pred_region
      %154 = dma.done [#allocation3], 128
    $region29: #{tpu_custom_call.1} parent=1 // pred_fallthru
      _
    %155 = vsyncpa [#allocation3], 1

</llo_original>
